<compile_context>
chip_gen: v7x
topology: tpu7x:2x2x1
jax: 0.10.0
libtpu: 0.0.40
codegen_flags: <defaults>
</compile_context>

<pallas_src>
import functools

import jax
import jax.numpy as jnp
from jax.experimental import pallas as pl
from jax.experimental.pallas import tpu as pltpu

LANE = 128
MAX_LANES = 2048                      # lane width cap per grid block
VMEM_LIMIT = 32 * 1024 * 1024


def _round_up(x, m):
    return ((x + m - 1) // m) * m


# ---------------------------------------------------------------------------
# pltpu.roll sign-convention probe (version-robust guard).
# Returns s such that pltpu.roll(x, shift=s, axis=1)[:, j] == x[:, j+1],
# or 0 if roll is unusable (the kernel then falls back to slice+concat).
# ---------------------------------------------------------------------------
_ROLL_SHIFT_MODE = None


def _probe_roll_shift_mode():
    def _krn(x_ref, o_ref):
        o_ref[...] = pltpu.roll(x_ref[...], shift=-1, axis=1)

    try:
        x = jax.lax.broadcasted_iota(jnp.float32, (8, LANE), 1)
        out = pl.pallas_call(
            _krn, out_shape=jax.ShapeDtypeStruct((8, LANE), jnp.float32))(x)
        v = int(jax.device_get(out[0, 0]))
        if v == 1:
            return -1          # numpy convention: roll(x, -1)[j] == x[j+1]
        if v == LANE - 1:
            return 1           # opposite convention
    except Exception:          # lowering / runtime issue -> safe fallback
        pass
    return 0


def _get_roll_shift_mode():
    global _ROLL_SHIFT_MODE
    if _ROLL_SHIFT_MODE is None:
        _ROLL_SHIFT_MODE = _probe_roll_shift_mode()
    return _ROLL_SHIFT_MODE


# ---------------------------------------------------------------------------
# Kernel
# ---------------------------------------------------------------------------
def inception1_kernel(x_ref, w1_ref, w2s_ref, b1_ref, b2_ref, mw_ref, out_ref,
                      *, cd, shift_mode):
    # x_ref:   (C_pad, N_blk)  channels x flattened lanes (samples / L-chunks packed)
    # w1_ref:  (Cd, C_pad)     k=1 weight (channel-padded), resident
    # w2s_ref: (2*Cd, Cd)      k=2 weight, taps 0 and 1 stacked on sublanes, resident
    # b1_ref:  (Cd, 1)         k=1 bias, resident (added in f32)
    # b2_ref:  (Cd, 1)         k=2 bias, resident (added in f32)
    # mw_ref:  (8, Cd)         row 0 = 1/Cd, rest 0  -> channel mean on the MXU
    # out_ref: (2, N_blk)      row 0 = channel mean, row 1 = channel max
    x = x_ref[...]

    # Conv1d k=1 + bias + ReLU: one MXU matmul over a lane-dense slab, f32 accum.
    h1 = jnp.maximum(
        jnp.dot(w1_ref[...], x, preferred_element_type=jnp.float32) + b1_ref[...],
        0.0)                                                     # (Cd, N_blk) f32

    # Conv1d k=2 (valid): ONE stacked matmul (128-row LHS fills an MXU pass),
    # then split into the tap-0 / tap-1 partial sums on a clean sublane boundary.
    h1m = h1.astype(w2s_ref.dtype)
    s = jnp.dot(w2s_ref[...], h1m, preferred_element_type=jnp.float32)  # (2Cd, N_blk)
    sa = s[:cd, :]
    sb = s[cd:, :]

    # Tap-1 needs lane j+1: a single XLU lane-rotate of the *value* keeps both MXU
    # operands aligned.  The wrapped last lane of every block always lands on an
    # output column the wrapper discards (sample/chunk boundary or padding).
    if shift_mode != 0:
        sb_next = pltpu.roll(sb, shift=shift_mode, axis=1)
    else:  # fallback if the pltpu.roll convention could not be probed
        sb_next = jnp.concatenate([sb[:, 1:], sb[:, :1]], axis=1)

    h2 = jnp.maximum(sa + sb_next + b2_ref[...], 0.0)            # (Cd, N_blk) f32

    # Channel mean rides on the MXU (it has slack); only the max uses the VPU/XLU.
    avg = jnp.dot(mw_ref[...], h2, preferred_element_type=jnp.float32)  # (8, N_blk)
    out_ref[0:1, :] = avg[0:1, :]
    out_ref[1:2, :] = jnp.max(h2, axis=0, keepdims=True)


# ---------------------------------------------------------------------------
# Wrapper
# ---------------------------------------------------------------------------
@functools.partial(jax.jit, static_argnames=("mxu_dtype", "shift_mode"))
def _inception1_impl(x, w1, b1, w2, b2, *, mxu_dtype, shift_mode):
    B, C_in, L = x.shape
    Cd = w1.shape[0]
    f32 = jnp.float32
    C_pad = _round_up(C_in, 8)

    # ---- pack the input into lane-dense (C_pad, G * N_blk) blocks -------------
    # TODO(synk): fuse this NCL -> (C, lanes) re-layout into the kernel (BlockSpec
    # over the original x + manual DMA) to remove the wrapper transpose copy.
    if L <= MAX_LANES:
        # Whole samples per block; keep G >= 2 so both TensorCores (v7x) get work.
        TB = min(B, max(1, MAX_LANES // L))
        if B >= 2:
            TB = min(TB, -(-B // 2))
        G = -(-B // TB)
        B_pad = G * TB
        N_blk = _round_up(TB * L, LANE)
        xt = jnp.transpose(x, (1, 0, 2)).astype(f32)              # (C_in, B, L)
        if B_pad > B:
            xt = jnp.pad(xt, ((0, 0), (0, B_pad - B), (0, 0)))
        xt = xt.reshape(C_in, G, TB * L)
        x_slab = jnp.pad(xt, ((0, C_pad - C_in), (0, 0), (0, N_blk - TB * L)))
        x_slab = x_slab.reshape(C_pad, G * N_blk)
    else:
        # Long sequence: tile L with a 1-column halo per chunk.  Caps per-step
        # VMEM (critical on v7x's 64 MiB) and keeps the rotate trick valid.
        N_blk = MAX_LANES
        V = N_blk - 1                          # valid output columns per chunk
        NC = -(-(L - 1) // V)                  # chunks per sample
        G = B * NC
        Lp = NC * V + 1
        xp = jnp.pad(x.astype(f32), ((0, 0), (0, 0), (0, Lp - L)))
        base = xp[:, :, :NC * V].reshape(B, C_in, NC, V)
        halo = xp[:, :, V:Lp:V]                                   # (B, C_in, NC)
        win = jnp.concatenate([base, halo[:, :, :, None]], axis=3)  # (B,C_in,NC,N_blk)
        x_slab = jnp.transpose(win, (1, 0, 2, 3)).reshape(C_in, G * N_blk)
        x_slab = jnp.pad(x_slab, ((0, C_pad - C_in), (0, 0)))
    x_slab = x_slab.astype(mxu_dtype)

    # ---- small resident operands ----------------------------------------------
    w1m = jnp.pad(w1.reshape(Cd, C_in).astype(f32),
                  ((0, 0), (0, C_pad - C_in))).astype(mxu_dtype)   # (Cd, C_pad)
    w2s = jnp.concatenate([w2[:, :, 0], w2[:, :, 1]], axis=0).astype(mxu_dtype)
    b1m = b1.reshape(Cd, 1).astype(f32)
    b2m = b2.reshape(Cd, 1).astype(f32)
    mw = jnp.zeros((8, Cd), f32).at[0, :].set(1.0 / Cd)            # mean-on-MXU row

    kernel = functools.partial(inception1_kernel, cd=Cd, shift_mode=shift_mode)
    out = pl.pallas_call(
        kernel,
        out_shape=jax.ShapeDtypeStruct((2, G * N_blk), f32),
        grid_spec=pltpu.PrefetchScalarGridSpec(
            num_scalar_prefetch=0,
            grid=(G,),
            in_specs=[
                # NOTE: if profiling shows exposed DMA latency at large G, add
                # pipeline_mode=pl.Buffered(3) on this (small) streamed block.
                pl.BlockSpec((C_pad, N_blk), lambda g: (0, g)),    # x slab (streamed)
                pl.BlockSpec((Cd, C_pad), lambda g: (0, 0)),       # w1, resident
                pl.BlockSpec((2 * Cd, Cd), lambda g: (0, 0)),      # w2 stacked, resident
                pl.BlockSpec((Cd, 1), lambda g: (0, 0)),           # b1, resident
                pl.BlockSpec((Cd, 1), lambda g: (0, 0)),           # b2, resident
                pl.BlockSpec((8, Cd), lambda g: (0, 0)),           # mean weights, resident
            ],
            out_specs=pl.BlockSpec((2, N_blk), lambda g: (0, g)),  # lane-dense store
        ),
        compiler_params=pltpu.CompilerParams(
            dimension_semantics=("parallel",),
            vmem_limit_bytes=VMEM_LIMIT),
    )(x_slab, w1m, w2s, b1m, b2m, mw)

    # ---- unpack to the torch layout: (B, 2*(L-1)) -------------------------------
    if L <= MAX_LANES:
        out = out.reshape(2, G, N_blk)[:, :, :TB * L]
        out = out.reshape(2, B_pad, L)[:, :B, :L - 1]
    else:
        out = out.reshape(2, B, NC, N_blk)[:, :, :, :V]
        out = out.reshape(2, B, NC * V)[:, :, :L - 1]
    return jnp.concatenate([out[0], out[1]], axis=1)               # (B, 2*(L-1))


def inception1_forward(x, w1, b1, w2, b2, *, mxu_dtype=jnp.float32):
    """x: (B, C_in, L) float32 -> (B, 2*(L-1)) float32.

    mxu_dtype=jnp.bfloat16 halves x-slab HBM/VMEM bytes and doubles MXU rate on
    v6e/v7x; accumulation and all elementwise math stay f32 (v5e-safe)."""
    return _inception1_impl(x, w1, b1, w2, b2,
                            mxu_dtype=mxu_dtype,
                            shift_mode=_get_roll_shift_mode())


def inception1_reference(x, w1, b1, w2, b2):
    """Pure-JAX reference mirroring the PyTorch forward."""
    h1 = jnp.einsum("oc,bcl->bol", w1[:, :, 0], x) + b1[None, :, None]
    h1 = jnp.maximum(h1, 0.0)
    h2 = (jnp.einsum("oc,bcl->bol", w2[:, :, 0], h1[:, :, :-1])
          + jnp.einsum("oc,bcl->bol", w2[:, :, 1], h1[:, :, 1:])
          + b2[None, :, None])
    h2 = jnp.maximum(h2, 0.0)
    avg = jnp.mean(h2, axis=1)
    mx = jnp.max(h2, axis=1)
    return jnp.concatenate([avg, mx], axis=1)


if __name__ == "__main__":
    key = jax.random.PRNGKey(0)
    kx, k1, k2, k3, k4 = jax.random.split(key, 5)

    B, C_in, L, Cd = 2, 4, 16, 64          # module defaults: input_dim=4, conv_dim=64
    x = jax.random.normal(kx, (B, C_in, L), dtype=jnp.float32)
    w1 = jax.random.normal(k1, (Cd, C_in, 1), dtype=jnp.float32) * 0.1
    b1 = jax.random.normal(k2, (Cd,), dtype=jnp.float32) * 0.1
    w2 = jax.random.normal(k3, (Cd, Cd, 2), dtype=jnp.float32) * 0.1
    b2 = jax.random.normal(k4, (Cd,), dtype=jnp.float32) * 0.1

    # 1) Small case (packed-samples path), f32 MXU operands: exact-parity check.
    out = jax.block_until_ready(inception1_forward(x, w1, b1, w2, b2))
    ref = inception1_reference(x, w1, b1, w2, b2)
    assert out.shape == (B, 2 * (L - 1)), out.shape
    assert jnp.allclose(out, ref, atol=1e-4, rtol=1e-4), \
        float(jnp.max(jnp.abs(out - ref)))

    # 2) Long-sequence case: chunked-L path with 1-column halo (v7x VMEM cap).
    L2 = 2300
    x2 = jax.random.normal(kx, (B, C_in, L2), dtype=jnp.float32)
    out2 = jax.block_until_ready(inception1_forward(x2, w1, b1, w2, b2))
    ref2 = inception1_reference(x2, w1, b1, w2, b2)
    assert out2.shape == (B, 2 * (L2 - 1)), out2.shape
    assert jnp.allclose(out2, ref2, atol=1e-4, rtol=1e-4), \
        float(jnp.max(jnp.abs(out2 - ref2)))

    # 3) bf16 MXU operands (recommended on v6e/v7x), f32 accumulation/elementwise.
    out3 = jax.block_until_ready(
        inception1_forward(x, w1, b1, w2, b2, mxu_dtype=jnp.bfloat16))
    assert jnp.allclose(out3, ref, atol=5e-2, rtol=5e-2), \
        float(jnp.max(jnp.abs(out3 - ref)))

    print("KERNEL_OK")
</pallas_src>

<mosaic_0001>
module attributes {stable_mosaic.version = 11 : i64} {
  func.func @inception1_kernel(%arg0: i32, %arg1: memref<8x128xf32, #tpu.memory_space<vmem>>, %arg2: memref<64x8xf32, #tpu.memory_space<vmem>>, %arg3: memref<128x64xf32, #tpu.memory_space<vmem>>, %arg4: memref<64x1xf32, #tpu.memory_space<vmem>>, %arg5: memref<64x1xf32, #tpu.memory_space<vmem>>, %arg6: memref<8x64xf32, #tpu.memory_space<vmem>>, %arg7: memref<2x128xf32, #tpu.memory_space<vmem>>) attributes {dimension_semantics = [#tpu.dimension_semantics<parallel>], iteration_bounds = array<i64: 2>, scalar_prefetch = 0 : i64, scratch_operands = 0 : i64, tpu.core_type = #tpu.core_type<tc>, window_params = [{transform_indices = @transform_0, window_bounds = array<i64: 8, 128>}, {pipeline_mode = #tpu.pipeline_mode<synchronous>, transform_indices = @transform_1, window_bounds = array<i64: 64, 8>}, {pipeline_mode = #tpu.pipeline_mode<synchronous>, transform_indices = @transform_2, window_bounds = array<i64: 128, 64>}, {pipeline_mode = #tpu.pipeline_mode<synchronous>, transform_indices = @transform_3, window_bounds = array<i64: 64, 1>}, {pipeline_mode = #tpu.pipeline_mode<synchronous>, transform_indices = @transform_4, window_bounds = array<i64: 64, 1>}, {pipeline_mode = #tpu.pipeline_mode<synchronous>, transform_indices = @transform_5, window_bounds = array<i64: 8, 64>}, {transform_indices = @transform_6, window_bounds = array<i64: 2, 128>}]} {
    %c0 = arith.constant 0 : index
    %c0_0 = arith.constant 0 : index
    %0 = vector.load %arg1[%c0, %c0_0] : memref<8x128xf32, #tpu.memory_space<vmem>>, vector<8x128xf32>
    %c0_1 = arith.constant 0 : index
    %c0_2 = arith.constant 0 : index
    %1 = vector.load %arg2[%c0_1, %c0_2] : memref<64x8xf32, #tpu.memory_space<vmem>>, vector<64x8xf32>
    %cst = arith.constant dense<0.000000e+00> : vector<64x128xf32>
    %2 = tpu.matmul %1, %0, %cst {dimension_numbers = #tpu.dot_dimension_numbers<[1], [0], [0], [1], [0, 0, 1, 1], [], []>} : vector<64x8xf32>, vector<8x128xf32>, vector<64x128xf32> -> vector<64x128xf32>
    %c0_3 = arith.constant 0 : index
    %c0_4 = arith.constant 0 : index
    %3 = vector.load %arg4[%c0_3, %c0_4] : memref<64x1xf32, #tpu.memory_space<vmem>>, vector<64x1xf32>
    %4 = vector.broadcast %3 : vector<64x1xf32> to vector<64x128xf32>
    %5 = arith.addf %2, %4 : vector<64x128xf32>
    %cst_5 = arith.constant 0.000000e+00 : f32
    %6 = vector.broadcast %cst_5 : f32 to vector<64x128xf32>
    %7 = arith.maximumf %5, %6 : vector<64x128xf32>
    %c0_6 = arith.constant 0 : index
    %c0_7 = arith.constant 0 : index
    %8 = vector.load %arg3[%c0_6, %c0_7] : memref<128x64xf32, #tpu.memory_space<vmem>>, vector<128x64xf32>
    %cst_8 = arith.constant dense<0.000000e+00> : vector<128x128xf32>
    %9 = tpu.matmul %8, %7, %cst_8 {dimension_numbers = #tpu.dot_dimension_numbers<[1], [0], [0], [1], [0, 0, 1, 1], [], []>} : vector<128x64xf32>, vector<64x128xf32>, vector<128x128xf32> -> vector<128x128xf32>
    %10 = vector.extract_strided_slice %9 {offsets = [0, 0], sizes = [64, 128], strides = [1, 1]} : vector<128x128xf32> to vector<64x128xf32>
    %11 = vector.extract_strided_slice %9 {offsets = [64, 0], sizes = [64, 128], strides = [1, 1]} : vector<128x128xf32> to vector<64x128xf32>
    %12 = vector.extract_strided_slice %11 {offsets = [0, 1], sizes = [64, 127], strides = [1, 1]} : vector<64x128xf32> to vector<64x127xf32>
    %13 = vector.extract_strided_slice %11 {offsets = [0, 0], sizes = [64, 1], strides = [1, 1]} : vector<64x128xf32> to vector<64x1xf32>
    %14 = tpu.concatenate %12, %13 in 1 : vector<64x127xf32>, vector<64x1xf32> -> vector<64x128xf32>
    %15 = arith.addf %10, %14 : vector<64x128xf32>
    %c0_9 = arith.constant 0 : index
    %c0_10 = arith.constant 0 : index
    %16 = vector.load %arg5[%c0_9, %c0_10] : memref<64x1xf32, #tpu.memory_space<vmem>>, vector<64x1xf32>
    %17 = vector.broadcast %16 : vector<64x1xf32> to vector<64x128xf32>
    %18 = arith.addf %15, %17 : vector<64x128xf32>
    %cst_11 = arith.constant 0.000000e+00 : f32
    %19 = vector.broadcast %cst_11 : f32 to vector<64x128xf32>
    %20 = arith.maximumf %18, %19 : vector<64x128xf32>
    %c0_12 = arith.constant 0 : index
    %c0_13 = arith.constant 0 : index
    %21 = vector.load %arg6[%c0_12, %c0_13] : memref<8x64xf32, #tpu.memory_space<vmem>>, vector<8x64xf32>
    %cst_14 = arith.constant dense<0.000000e+00> : vector<8x128xf32>
    %22 = tpu.matmul %21, %20, %cst_14 {dimension_numbers = #tpu.dot_dimension_numbers<[1], [0], [0], [1], [0, 0, 1, 1], [], []>} : vector<8x64xf32>, vector<64x128xf32>, vector<8x128xf32> -> vector<8x128xf32>
    %23 = vector.extract_strided_slice %22 {offsets = [0, 0], sizes = [1, 128], strides = [1, 1]} : vector<8x128xf32> to vector<1x128xf32>
    %c0_15 = arith.constant 0 : index
    %c0_16 = arith.constant 0 : index
    %24 = vector.load %arg7[%c0_15, %c0_16] : memref<2x128xf32, #tpu.memory_space<vmem>>, vector<1x128xf32>
    tpu.vector_store %arg7[%c0_15, %c0_16], %23 {strides = array<i32>} : memref<2x128xf32, #tpu.memory_space<vmem>>, vector<1x128xf32>,
    %cst_17 = arith.constant dense<0xFF800000> : vector<128xf32>
    %25 = vector.multi_reduction <maximumf>, %20, %cst_17 [0] : vector<64x128xf32> to vector<128xf32>
    %26 = vector.shape_cast %25 : vector<128xf32> to vector<1x128xf32>
    %c1 = arith.constant 1 : index
    %c0_18 = arith.constant 0 : index
    %27 = vector.load %arg7[%c1, %c0_18] : memref<2x128xf32, #tpu.memory_space<vmem>>, vector<1x128xf32>
    tpu.vector_store %arg7[%c1, %c0_18], %26 {strides = array<i32>} : memref<2x128xf32, #tpu.memory_space<vmem>>, vector<1x128xf32>,
    return
  }
  func.func @transform_0(%arg0: i32) -> (i32, i32) {
    %c0_i32 = arith.constant 0 : i32
    %c0_i32_0 = arith.constant 0 : i32
    return %c0_i32, %arg0 : i32, i32
  }
  func.func @transform_1(%arg0: i32) -> (i32, i32) {
    %c0_i32 = arith.constant 0 : i32
    %c0_i32_0 = arith.constant 0 : i32
    %c0_i32_1 = arith.constant 0 : i32
    return %c0_i32, %c0_i32_0 : i32, i32
  }
  func.func @transform_2(%arg0: i32) -> (i32, i32) {
    %c0_i32 = arith.constant 0 : i32
    %c0_i32_0 = arith.constant 0 : i32
    %c0_i32_1 = arith.constant 0 : i32
    return %c0_i32, %c0_i32_0 : i32, i32
  }
  func.func @transform_3(%arg0: i32) -> (i32, i32) {
    %c0_i32 = arith.constant 0 : i32
    %c0_i32_0 = arith.constant 0 : i32
    %c0_i32_1 = arith.constant 0 : i32
    return %c0_i32, %c0_i32_0 : i32, i32
  }
  func.func @transform_4(%arg0: i32) -> (i32, i32) {
    %c0_i32 = arith.constant 0 : i32
    %c0_i32_0 = arith.constant 0 : i32
    %c0_i32_1 = arith.constant 0 : i32
    return %c0_i32, %c0_i32_0 : i32, i32
  }
  func.func @transform_5(%arg0: i32) -> (i32, i32) {
    %c0_i32 = arith.constant 0 : i32
    %c0_i32_0 = arith.constant 0 : i32
    %c0_i32_1 = arith.constant 0 : i32
    return %c0_i32, %c0_i32_0 : i32, i32
  }
  func.func @transform_6(%arg0: i32) -> (i32, i32) {
    %c0_i32 = arith.constant 0 : i32
    %c0_i32_0 = arith.constant 0 : i32
    return %c0_i32, %arg0 : i32, i32
  }
}

</mosaic_0001>

<llo_original>
// kernel: _inception1_impl.1
$region0: #{_inception1_impl.1}
  #allocation0 [shape = 'u32[]', space=smem, size = 0x4, offset = 0x4, fixed_abs, tag = 'smem constant byte address 0x4 - core index']
  #allocation1 [shape = 'u32[144,128]{1,0:T(1,128)}', space=vmem, size = 0x12000, scoped, tag = 'internal scratch']
  %s0 = inlined_call_operand.vmem [shape: f32[8,256], index: 0, kind: input, shape index: {}]
  %s1 = inlined_call_operand.vmem [shape: f32[64,8], index: 1, kind: input, shape index: {}]
  %s2 = inlined_call_operand.vmem [shape: f32[128,64], index: 2, kind: input, shape index: {}]
  %s3 = inlined_call_operand.vmem [shape: f32[64,1], index: 3, kind: input, shape index: {}]
  %s4 = inlined_call_operand.vmem [shape: f32[64,1], index: 4, kind: input, shape index: {}]
  %s5 = inlined_call_operand.vmem [shape: f32[8,64], index: 5, kind: input, shape index: {}]
  %s6 = inlined_call_operand.vmem [shape: f32[2,256], index: 6, kind: output, shape index: {}]
  %s7 = sld [smem:[#allocation0]]
  $region57: #{_inception1_impl.1} parent=0
    _
  %s9 = ssub.s32 1, %s7
  %s10 = scalar_select 0, %s9, %s7
  loop: start=0, step=1, limit=4
  $region2: #{_inception1_impl.1} parent=0 // loop_pre_header
    _
  $region3: #{_inception1_impl.1} parent=0 // loop_header
    %s12 = sphi 0, %s16
    %p13 = scmp.ge.s32.totalorder %s12, 4
    %s22 = sphi 0, %s24
    %s25 = sphi 0, %s22
    %s26 = sphi 0, %s25
    %s42 = sphi 0, %s26
    %s46 = sphi 0, %s46
    %s48 = sphi 0, %s46
    %s49 = sphi 0, %s48
    %s63 = sphi 0, %s49
    %s67 = sphi 0, %s67
    %s69 = sphi 0, %s67
    %s70 = sphi 0, %s69
    %s84 = sphi 0, %s70
    %s88 = sphi 0, %s88
    %s90 = sphi 0, %s88
    %s91 = sphi 0, %s90
    %s105 = sphi 0, %s91
    %s109 = sphi 0, %s109
    %s111 = sphi 0, %s109
    %s112 = sphi 0, %s111
    %s126 = sphi 0, %s112
    %s130 = sphi 0, %s130
    %s132 = sphi 0, %s130
    %s133 = sphi 0, %s132
    %s147 = sphi 0, %s133
    %s153 = sphi 0, %s155
    %s156 = sphi 0, %s153
    %s157 = sphi 0, %s156
    %s173 = sphi 0, %s157
  $region4: #{_inception1_impl.1} parent=0 // loop_header_branch
    %15 = sbr.rel (%p13) target = $region8
  $region5: #{_inception1_impl.1} parent=0 // loop_body
    %s17 = ssub.s32 %s12, 1
    %s18 = ssub.s32 %s12, 2
    %s19 = sadd.s32 %s12, 1
    %s20 = ssub.s32 %s12, %s19
    %p21 = scmp.eq.s32.totalorder %s20, 0
    %s23 = sadd.s32 %s22, 1
    %s24 = scalar_select %p21, %s22, %s23
    %p27 = pneg %p21
    %p28 = scmp.eq.s32.totalorder %s12, 1
    %p29 = por %p27, %p28
    %p30 = scmp.ne.s32.totalorder %s22, %s25
    %p31 = scmp.eq.s32.totalorder %s12, 0
    %p32 = por %p30, %p31
    %p33 = scmp.ne.s32.totalorder %s22, %s25
    %p34 = scmp.eq.s32.totalorder %s17, 1
    %p35 = por %p33, %p34
    %p36 = scmp.ne.s32.totalorder %s25, %s26
    %p37 = scmp.eq.s32.totalorder %s17, 0
    %p38 = por %p36, %p37
    %p39 = scmp.ne.s32.totalorder %s25, %s26
    %p40 = scmp.eq.s32.totalorder %s18, 1
    %p41 = por %p39, %p40
    %p43 = scmp.ne.s32.totalorder %s26, %s42
    %p44 = scmp.eq.s32.totalorder %s18, 0
    %p45 = por %p43, %p44
    %s47 = sadd.s32 %s46, 1
    %p50 = scmp.eq.s32.totalorder %s12, 1
    %p51 = scmp.ne.s32.totalorder %s46, %s48
    %p52 = scmp.eq.s32.totalorder %s12, 0
    %p53 = por %p51, %p52
    %p54 = scmp.ne.s32.totalorder %s46, %s48
    %p55 = scmp.eq.s32.totalorder %s17, 1
    %p56 = por %p54, %p55
    %p57 = scmp.ne.s32.totalorder %s48, %s49
    %p58 = scmp.eq.s32.totalorder %s17, 0
    %p59 = por %p57, %p58
    %p60 = scmp.ne.s32.totalorder %s48, %s49
    %p61 = scmp.eq.s32.totalorder %s18, 1
    %p62 = por %p60, %p61
    %p64 = scmp.ne.s32.totalorder %s49, %s63
    %p65 = scmp.eq.s32.totalorder %s18, 0
    %p66 = por %p64, %p65
    %s68 = sadd.s32 %s67, 1
    %p71 = scmp.eq.s32.totalorder %s12, 1
    %p72 = scmp.ne.s32.totalorder %s67, %s69
    %p73 = scmp.eq.s32.totalorder %s12, 0
    %p74 = por %p72, %p73
    %p75 = scmp.ne.s32.totalorder %s67, %s69
    %p76 = scmp.eq.s32.totalorder %s17, 1
    %p77 = por %p75, %p76
    %p78 = scmp.ne.s32.totalorder %s69, %s70
    %p79 = scmp.eq.s32.totalorder %s17, 0
    %p80 = por %p78, %p79
    %p81 = scmp.ne.s32.totalorder %s69, %s70
    %p82 = scmp.eq.s32.totalorder %s18, 1
    %p83 = por %p81, %p82
    %p85 = scmp.ne.s32.totalorder %s70, %s84
    %p86 = scmp.eq.s32.totalorder %s18, 0
    %p87 = por %p85, %p86
    %s89 = sadd.s32 %s88, 1
    %p92 = scmp.eq.s32.totalorder %s12, 1
    %p93 = scmp.ne.s32.totalorder %s88, %s90
    %p94 = scmp.eq.s32.totalorder %s12, 0
    %p95 = por %p93, %p94
    %p96 = scmp.ne.s32.totalorder %s88, %s90
    %p97 = scmp.eq.s32.totalorder %s17, 1
    %p98 = por %p96, %p97
    %p99 = scmp.ne.s32.totalorder %s90, %s91
    %p100 = scmp.eq.s32.totalorder %s17, 0
    %p101 = por %p99, %p100
    %p102 = scmp.ne.s32.totalorder %s90, %s91
    %p103 = scmp.eq.s32.totalorder %s18, 1
    %p104 = por %p102, %p103
    %p106 = scmp.ne.s32.totalorder %s91, %s105
    %p107 = scmp.eq.s32.totalorder %s18, 0
    %p108 = por %p106, %p107
    %s110 = sadd.s32 %s109, 1
    %p113 = scmp.eq.s32.totalorder %s12, 1
    %p114 = scmp.ne.s32.totalorder %s109, %s111
    %p115 = scmp.eq.s32.totalorder %s12, 0
    %p116 = por %p114, %p115
    %p117 = scmp.ne.s32.totalorder %s109, %s111
    %p118 = scmp.eq.s32.totalorder %s17, 1
    %p119 = por %p117, %p118
    %p120 = scmp.ne.s32.totalorder %s111, %s112
    %p121 = scmp.eq.s32.totalorder %s17, 0
    %p122 = por %p120, %p121
    %p123 = scmp.ne.s32.totalorder %s111, %s112
    %p124 = scmp.eq.s32.totalorder %s18, 1
    %p125 = por %p123, %p124
    %p127 = scmp.ne.s32.totalorder %s112, %s126
    %p128 = scmp.eq.s32.totalorder %s18, 0
    %p129 = por %p127, %p128
    %s131 = sadd.s32 %s130, 1
    %p134 = scmp.eq.s32.totalorder %s12, 1
    %p135 = scmp.ne.s32.totalorder %s130, %s132
    %p136 = scmp.eq.s32.totalorder %s12, 0
    %p137 = por %p135, %p136
    %p138 = scmp.ne.s32.totalorder %s130, %s132
    %p139 = scmp.eq.s32.totalorder %s17, 1
    %p140 = por %p138, %p139
    %p141 = scmp.ne.s32.totalorder %s132, %s133
    %p142 = scmp.eq.s32.totalorder %s17, 0
    %p143 = por %p141, %p142
    %p144 = scmp.ne.s32.totalorder %s132, %s133
    %p145 = scmp.eq.s32.totalorder %s18, 1
    %p146 = por %p144, %p145
    %p148 = scmp.ne.s32.totalorder %s133, %s147
    %p149 = scmp.eq.s32.totalorder %s18, 0
    %p150 = por %p148, %p149
    %s151 = ssub.s32 %s12, %s19
    %p152 = scmp.eq.s32.totalorder %s151, 0
    %s154 = sadd.s32 %s153, 1
    %s155 = scalar_select %p152, %s153, %s154
    %p158 = pneg %p152
    %p159 = scmp.eq.s32.totalorder %s12, 1
    %p160 = por %p158, %p159
    %p161 = scmp.ne.s32.totalorder %s153, %s156
    %p162 = scmp.eq.s32.totalorder %s12, 0
    %p163 = por %p161, %p162
    %p164 = scmp.ne.s32.totalorder %s153, %s156
    %p165 = scmp.eq.s32.totalorder %s17, 1
    %p166 = por %p164, %p165
    %p167 = scmp.ne.s32.totalorder %s156, %s157
    %p168 = scmp.eq.s32.totalorder %s17, 0
    %p169 = por %p167, %p168
    %p170 = scmp.ne.s32.totalorder %s156, %s157
    %p171 = scmp.eq.s32.totalorder %s18, 1
    %p172 = por %p170, %p171
    %p174 = scmp.ne.s32.totalorder %s157, %s173
    %p175 = scmp.eq.s32.totalorder %s18, 0
    %p176 = por %p174, %p175
    %p177 = scmp.le.s32.totalorder 1, %s12
    %p178 = scmp.lt.s32.totalorder %s12, 3
    %p179 = pnand %p177, %p178
    %p180 = pneg %p179
    // Predicated region
    $region9: #{_inception1_impl.1} parent=5 // pred_check
      _
    $region10: #{_inception1_impl.1} parent=5 // pred_check_branch
      %182 = sbr.rel (%p179) target = $region12
    $region11: #{_inception1_impl.1} parent=5 // pred_region
      %s183 = ssub.s32 %s12, 1
      // Predicated region
      $region13: #{_inception1_impl.1} parent=11 // pred_check
        %p184 = pneg %p59
      $region14: #{_inception1_impl.1} parent=11 // pred_check_branch
        %186 = sbr.rel (%p184) target = $region16
      $region15: #{_inception1_impl.1} parent=11 // pred_region
        _
      $region16: #{_inception1_impl.1} parent=11 // pred_fallthru
        _
      // Predicated region
      $region17: #{_inception1_impl.1} parent=11 // pred_check
        %p187 = pneg %p80
      $region18: #{_inception1_impl.1} parent=11 // pred_check_branch
        %189 = sbr.rel (%p187) target = $region20
      $region19: #{_inception1_impl.1} parent=11 // pred_region
        _
      $region20: #{_inception1_impl.1} parent=11 // pred_fallthru
        _
      // Predicated region
      $region21: #{_inception1_impl.1} parent=11 // pred_check
        %p190 = pneg %p101
      $region22: #{_inception1_impl.1} parent=11 // pred_check_branch
        %192 = sbr.rel (%p190) target = $region24
      $region23: #{_inception1_impl.1} parent=11 // pred_region
        _
      $region24: #{_inception1_impl.1} parent=11 // pred_fallthru
        _
      // Predicated region
      $region25: #{_inception1_impl.1} parent=11 // pred_check
        %p193 = pneg %p122
      $region26: #{_inception1_impl.1} parent=11 // pred_check_branch
        %195 = sbr.rel (%p193) target = $region28
      $region27: #{_inception1_impl.1} parent=11 // pred_region
        _
      $region28: #{_inception1_impl.1} parent=11 // pred_fallthru
        _
      // Predicated region
      $region29: #{_inception1_impl.1} parent=11 // pred_check
        %p196 = pneg %p143
      $region30: #{_inception1_impl.1} parent=11 // pred_check_branch
        %198 = sbr.rel (%p196) target = $region32
      $region31: #{_inception1_impl.1} parent=11 // pred_region
        _
      $region32: #{_inception1_impl.1} parent=11 // pred_fallthru
        _
    $region12: #{_inception1_impl.1} parent=5 // pred_fallthru
      _
    %p199 = scmp.lt.s32.totalorder %s12, 2
    // Predicated region
    $region33: #{_inception1_impl.1} parent=5 // pred_check
      %p200 = pneg %p199
    $region34: #{_inception1_impl.1} parent=5 // pred_check_branch
      %202 = sbr.rel (%p200) target = $region36
    $region35: #{_inception1_impl.1} parent=5 // pred_region
      // Predicated region
      $region37: #{_inception1_impl.1} parent=35 // pred_check
        %p203 = pneg %p32
      $region38: #{_inception1_impl.1} parent=35 // pred_check_branch
        %205 = sbr.rel (%p203) target = $region40
      $region39: #{_inception1_impl.1} parent=35 // pred_region
        %p206 = scmp.lt.s32.totalorder %s12, 1
        %s207 = scalar_select %p206, %s12, 1
        %s208 = smul.addr %s207, 8
        %s209 = scalar_lea.vmem %s0, %s208
      $region40: #{_inception1_impl.1} parent=35 // pred_fallthru
        _
    $region36: #{_inception1_impl.1} parent=5 // pred_fallthru
      _
    %p210 = scmp.le.s32.totalorder 1, %s12
    %p211 = scmp.lt.s32.totalorder %s12, 3
    %p212 = pnand %p210, %p211
    %p213 = pneg %p212
    // Predicated region
    $region41: #{_inception1_impl.1} parent=5 // pred_check
      _
    $region42: #{_inception1_impl.1} parent=5 // pred_check_branch
      %215 = sbr.rel (%p212) target = $region44
    $region43: #{_inception1_impl.1} parent=5 // pred_region
      %s216 = ssub.s32 %s12, 1
      %p217 = scmp.lt.s32.totalorder %s17, 1
      %s218 = scalar_select %p217, %s17, 1
      %s219 = smul.addr %s218, 8
      %s220 = scalar_lea.vmem %s0, %s219
      %p221 = pneg %p38
      %p222 = pneg %p35
      %p223 = pneg %p59
      %p224 = pneg %p56
      %p225 = pneg %p80
      %p226 = pneg %p77
      %p227 = pneg %p101
      %p228 = pneg %p98
      %p229 = pneg %p122
      %p230 = pneg %p119
      %p231 = pneg %p143
      %p232 = pneg %p140
      %p233 = pneg %p169
      %p234 = pneg %p166
      %p235 = scmp.lt.s32.totalorder %s17, 1
      %s236 = scalar_select %p235, %s17, 1
      %s237 = smul.addr %s236, 2
      %s238 = scalar_lea.vmem %s6, %s237
      %p239 = scmp.lt.s32.totalorder %s17, 1
      %s240 = scalar_select %p239, %s17, 1
      %s241 = smul.addr %s240, 8
      %s242 = scalar_lea.vmem %s0, %s241
      %p243 = scmp.lt.s32.totalorder %s17, 1
      %s244 = scalar_select %p243, %s17, 1
      %s245 = smul.addr %s244, 2
      %s246 = scalar_lea.vmem %s6, %s245
      %v247 = vld [vmem:[%s242] sm:$0xff]
      %v248 = vld [vmem:[%s1] sm:$0xff]
      %v249 = vld [vmem:[%s1 + $0x8] sm:$0xff]
      %v250 = vld [vmem:[%s1 + $0x10] sm:$0xff]
      %v251 = vld [vmem:[%s1 + $0x18] sm:$0xff]
      %v252 = vld [vmem:[%s1 + $0x20] sm:$0xff]
      %v253 = vld [vmem:[%s1 + $0x28] sm:$0xff]
      %v254 = vld [vmem:[%s1 + $0x30] sm:$0xff]
      %v255 = vld [vmem:[%s1 + $0x38] sm:$0xff]
      %v256 = vld [vmem:[%s3] sm:$0xff]
      %v257 = vld [vmem:[%s3 + $0x8] sm:$0xff]
      %v258 = vld [vmem:[%s3 + $0x10] sm:$0xff]
      %v259 = vld [vmem:[%s3 + $0x18] sm:$0xff]
      %v260 = vld [vmem:[%s3 + $0x20] sm:$0xff]
      %v261 = vld [vmem:[%s3 + $0x28] sm:$0xff]
      %v262 = vld [vmem:[%s3 + $0x30] sm:$0xff]
      %v263 = vld [vmem:[%s3 + $0x38] sm:$0xff]
      %265 = vset.pattern.permute.xlu0 0
      %266 = vperm.xlu0 %265, %v256
      %v267 = vpop.permute.xlu0 %266
      %270 = vset.pattern.permute.xlu0 0
      %271 = vperm.xlu0 %270, %v257
      %v272 = vpop.permute.xlu0 %271
      %275 = vset.pattern.permute.xlu0 0
      %276 = vperm.xlu0 %275, %v258
      %v277 = vpop.permute.xlu0 %276
      %280 = vset.pattern.permute.xlu0 0
      %281 = vperm.xlu0 %280, %v259
      %v282 = vpop.permute.xlu0 %281
      %285 = vset.pattern.permute.xlu0 0
      %286 = vperm.xlu0 %285, %v260
      %v287 = vpop.permute.xlu0 %286
      %290 = vset.pattern.permute.xlu0 0
      %291 = vperm.xlu0 %290, %v261
      %v292 = vpop.permute.xlu0 %291
      %295 = vset.pattern.permute.xlu0 0
      %296 = vperm.xlu0 %295, %v262
      %v297 = vpop.permute.xlu0 %296
      %300 = vset.pattern.permute.xlu0 0
      %301 = vperm.xlu0 %300, %v263
      %v302 = vpop.permute.xlu0 %301
      %vm304 = vcmask 64512
      %v306 = vsel %vm304, %v248, 0
      %v309 = vsel %vm304, %v249, 0
      %v312 = vsel %vm304, %v250, 0
      %v315 = vsel %vm304, %v251, 0
      %v318 = vsel %vm304, %v252, 0
      %v321 = vsel %vm304, %v253, 0
      %v324 = vsel %vm304, %v254, 0
      %v327 = vsel %vm304, %v255, 0
      %329 = vmatprep.subr.mxu0 0.0
      %330 = vmatpush1.msra.mxu0 %v247
      %331 = vmatprep.subr.mxu0 0.0
      %332 = vmatpush1.msra.mxu0 0.0
      %333 = vmatprep.subr.mxu0 0.0
      %334 = vmatpush1.msra.mxu0 0.0
      %335 = vmatprep.subr.mxu0 0.0
      %336 = vmatpush1.msra.mxu0 0.0
      %337 = vmatprep.subr.mxu0 0.0
      %338 = vmatpush1.msra.mxu0 0.0
      %339 = vmatprep.subr.mxu0 0.0
      %340 = vmatpush1.msra.mxu0 0.0
      %341 = vmatprep.subr.mxu0 0.0
      %342 = vmatpush1.msra.mxu0 0.0
      %343 = vmatprep.subr.mxu0 0.0
      %344 = vmatpush1.msra.mxu0 0.0
      %345 = vmatprep.subr.mxu0 0.0
      %346 = vmatpush1.msra.mxu0 0.0
      %347 = vmatprep.subr.mxu0 0.0
      %348 = vmatpush1.msra.mxu0 0.0
      %349 = vmatprep.subr.mxu0 0.0
      %350 = vmatpush1.msra.mxu0 0.0
      %351 = vmatprep.subr.mxu0 0.0
      %352 = vmatpush1.msra.mxu0 0.0
      %353 = vmatprep.subr.mxu0 0.0
      %354 = vmatpush1.msra.mxu0 0.0
      %355 = vmatprep.subr.mxu0 0.0
      %356 = vmatpush1.msra.mxu0 0.0
      %357 = vmatprep.subr.mxu0 0.0
      %358 = vmatpush1.msra.mxu0 0.0
      %359 = vmatprep.subr.mxu0 0.0
      %360 = vmatpush1.msra.mxu0 0.0
      %361 = vmatprep.subr.mxu0 0.0
      %362 = vmatpush1.msra.mxu0 0.0
      %363 = vmatprep.subr.mxu0 0.0
      %364 = vmatpush1.msra.mxu0 0.0
      %365 = vmatprep.subr.mxu0 0.0
      %366 = vmatpush1.msra.mxu0 0.0
      %367 = vmatprep.subr.mxu0 0.0
      %368 = vmatpush1.msra.mxu0 0.0
      %369 = vmatprep.subr.mxu0 0.0
      %370 = vmatpush1.msra.mxu0 0.0
      %371 = vmatprep.subr.mxu0 0.0
      %372 = vmatpush1.msra.mxu0 0.0
      %373 = vmatprep.subr.mxu0 0.0
      %374 = vmatpush1.msra.mxu0 0.0
      %375 = vmatprep.subr.mxu0 0.0
      %376 = vmatpush1.msra.mxu0 0.0
      %377 = vmatprep.subr.mxu0 0.0
      %378 = vmatpush1.msra.mxu0 0.0
      %379 = vmatprep.subr.mxu0 0.0
      %380 = vmatpush1.msra.mxu0 0.0
      %381 = vmatprep.subr.mxu0 0.0
      %382 = vmatpush1.msra.mxu0 0.0
      %383 = vmatprep.subr.mxu0 0.0
      %384 = vmatpush1.msra.mxu0 0.0
      %385 = vmatprep.subr.mxu0 0.0
      %386 = vmatpush1.msra.mxu0 0.0
      %387 = vmatprep.subr.mxu0 0.0
      %388 = vmatpush1.msra.mxu0 0.0
      %389 = vmatprep.subr.mxu0 0.0
      %390 = vmatpush1.msra.mxu0 0.0
      %391 = vmatprep.subr.mxu0 0.0
      %392 = vmatpush1.msra.mxu0 0.0
      %393 = vmatprep.mubr.f32.mxu0 0.0
      %394 = vmatmul.mubr.f32.gmra.mrb[0].mxu0 %v306
      %v395 = vpop.f32.mrb[0].mxu0
      %v396 = vadd.f32 %v267, %v395
      %v397 = vpop.f32.mrb[0].mxu0
      %398 = vmatprep.mubr.f32.mxu0 0.0
      %399 = vmatmul.mubr.f32.gmra.mrb[0].mxu0 %v309
      %v400 = vpop.f32.mrb[0].mxu0
      %v401 = vadd.f32 %v272, %v400
      %v402 = vpop.f32.mrb[0].mxu0
      %403 = vmatprep.mubr.f32.mxu0 0.0
      %404 = vmatmul.mubr.f32.gmra.mrb[0].mxu0 %v312
      %v405 = vpop.f32.mrb[0].mxu0
      %v406 = vadd.f32 %v277, %v405
      %v407 = vpop.f32.mrb[0].mxu0
      %408 = vmatprep.mubr.f32.mxu0 0.0
      %409 = vmatmul.mubr.f32.gmra.mrb[0].mxu0 %v315
      %v410 = vpop.f32.mrb[0].mxu0
      %v411 = vadd.f32 %v282, %v410
      %v412 = vpop.f32.mrb[0].mxu0
      %413 = vmatprep.mubr.f32.mxu0 0.0
      %414 = vmatmul.mubr.f32.gmra.mrb[0].mxu0 %v318
      %v415 = vpop.f32.mrb[0].mxu0
      %v416 = vadd.f32 %v287, %v415
      %v417 = vpop.f32.mrb[0].mxu0
      %418 = vmatprep.mubr.f32.mxu0 0.0
      %419 = vmatmul.mubr.f32.gmra.mrb[0].mxu0 %v321
      %v420 = vpop.f32.mrb[0].mxu0
      %v421 = vadd.f32 %v292, %v420
      %v422 = vpop.f32.mrb[0].mxu0
      %423 = vmatprep.mubr.f32.mxu0 0.0
      %424 = vmatmul.mubr.f32.gmra.mrb[0].mxu0 %v324
      %v425 = vpop.f32.mrb[0].mxu0
      %v426 = vadd.f32 %v297, %v425
      %v427 = vpop.f32.mrb[0].mxu0
      %428 = vmatprep.mubr.f32.mxu0 0.0
      %429 = vmatmul.mubr.f32.gmra.mrb[0].mxu0 %v327
      %v430 = vpop.f32.mrb[0].mxu0
      %v431 = vadd.f32 %v302, %v430
      %v432 = vpop.f32.mrb[0].mxu0
      %433 = vdwg.mxu0
      %v434 = vmax.f32 %v396, 0.0
      %v435 = vmax.f32 %v401, 0.0
      %v436 = vmax.f32 %v406, 0.0
      %v437 = vmax.f32 %v411, 0.0
      %v438 = vmax.f32 %v416, 0.0
      %v439 = vmax.f32 %v421, 0.0
      %v440 = vmax.f32 %v426, 0.0
      %v441 = vmax.f32 %v431, 0.0
      %v442 = vld [vmem:[%s2] sm:$0xff]
      %v443 = vld [vmem:[%s2 + $0x8] sm:$0xff]
      %v444 = vld [vmem:[%s2 + $0x10] sm:$0xff]
      %v445 = vld [vmem:[%s2 + $0x18] sm:$0xff]
      %v446 = vld [vmem:[%s2 + $0x20] sm:$0xff]
      %v447 = vld [vmem:[%s2 + $0x28] sm:$0xff]
      %v448 = vld [vmem:[%s2 + $0x30] sm:$0xff]
      %v449 = vld [vmem:[%s2 + $0x38] sm:$0xff]
      %v450 = vld [vmem:[%s2 + $0x40] sm:$0xff]
      %v451 = vld [vmem:[%s2 + $0x48] sm:$0xff]
      %v452 = vld [vmem:[%s2 + $0x50] sm:$0xff]
      %v453 = vld [vmem:[%s2 + $0x58] sm:$0xff]
      %v454 = vld [vmem:[%s2 + $0x60] sm:$0xff]
      %v455 = vld [vmem:[%s2 + $0x68] sm:$0xff]
      %v456 = vld [vmem:[%s2 + $0x70] sm:$0xff]
      %v457 = vld [vmem:[%s2 + $0x78] sm:$0xff]
      %vm458 = vcmask 523264
      %v460 = vsel %vm458, %v442, 0
      %v463 = vsel %vm458, %v443, 0
      %v466 = vsel %vm458, %v444, 0
      %v469 = vsel %vm458, %v445, 0
      %v472 = vsel %vm458, %v446, 0
      %v475 = vsel %vm458, %v447, 0
      %v478 = vsel %vm458, %v448, 0
      %v481 = vsel %vm458, %v449, 0
      %v484 = vsel %vm458, %v450, 0
      %v487 = vsel %vm458, %v451, 0
      %v490 = vsel %vm458, %v452, 0
      %v493 = vsel %vm458, %v453, 0
      %v496 = vsel %vm458, %v454, 0
      %v499 = vsel %vm458, %v455, 0
      %v502 = vsel %vm458, %v456, 0
      %v505 = vsel %vm458, %v457, 0
      %507 = vmatprep.subr.mxu0 0.0
      %508 = vmatpush1.msra.mxu0 %v434
      %509 = vmatprep.subr.mxu0 0.0
      %510 = vmatpush1.msra.mxu0 %v435
      %511 = vmatprep.subr.mxu0 0.0
      %512 = vmatpush1.msra.mxu0 %v436
      %513 = vmatprep.subr.mxu0 0.0
      %514 = vmatpush1.msra.mxu0 %v437
      %515 = vmatprep.subr.mxu0 0.0
      %516 = vmatpush1.msra.mxu0 %v438
      %517 = vmatprep.subr.mxu0 0.0
      %518 = vmatpush1.msra.mxu0 %v439
      %519 = vmatprep.subr.mxu0 0.0
      %520 = vmatpush1.msra.mxu0 %v440
      %521 = vmatprep.subr.mxu0 0.0
      %522 = vmatpush1.msra.mxu0 %v441
      %523 = vmatprep.subr.mxu0 0.0
      %524 = vmatpush1.msra.mxu0 0.0
      %525 = vmatprep.subr.mxu0 0.0
      %526 = vmatpush1.msra.mxu0 0.0
      %527 = vmatprep.subr.mxu0 0.0
      %528 = vmatpush1.msra.mxu0 0.0
      %529 = vmatprep.subr.mxu0 0.0
      %530 = vmatpush1.msra.mxu0 0.0
      %531 = vmatprep.subr.mxu0 0.0
      %532 = vmatpush1.msra.mxu0 0.0
      %533 = vmatprep.subr.mxu0 0.0
      %534 = vmatpush1.msra.mxu0 0.0
      %535 = vmatprep.subr.mxu0 0.0
      %536 = vmatpush1.msra.mxu0 0.0
      %537 = vmatprep.subr.mxu0 0.0
      %538 = vmatpush1.msra.mxu0 0.0
      %539 = vmatprep.subr.mxu0 0.0
      %540 = vmatpush1.msra.mxu0 0.0
      %541 = vmatprep.subr.mxu0 0.0
      %542 = vmatpush1.msra.mxu0 0.0
      %543 = vmatprep.subr.mxu0 0.0
      %544 = vmatpush1.msra.mxu0 0.0
      %545 = vmatprep.subr.mxu0 0.0
      %546 = vmatpush1.msra.mxu0 0.0
      %547 = vmatprep.subr.mxu0 0.0
      %548 = vmatpush1.msra.mxu0 0.0
      %549 = vmatprep.subr.mxu0 0.0
      %550 = vmatpush1.msra.mxu0 0.0
      %551 = vmatprep.subr.mxu0 0.0
      %552 = vmatpush1.msra.mxu0 0.0
      %553 = vmatprep.subr.mxu0 0.0
      %554 = vmatpush1.msra.mxu0 0.0
      %555 = vmatprep.subr.mxu0 0.0
      %556 = vmatpush1.msra.mxu0 0.0
      %557 = vmatprep.subr.mxu0 0.0
      %558 = vmatpush1.msra.mxu0 0.0
      %559 = vmatprep.subr.mxu0 0.0
      %560 = vmatpush1.msra.mxu0 0.0
      %561 = vmatprep.subr.mxu0 0.0
      %562 = vmatpush1.msra.mxu0 0.0
      %563 = vmatprep.subr.mxu0 0.0
      %564 = vmatpush1.msra.mxu0 0.0
      %565 = vmatprep.subr.mxu0 0.0
      %566 = vmatpush1.msra.mxu0 0.0
      %567 = vmatprep.subr.mxu0 0.0
      %568 = vmatpush1.msra.mxu0 0.0
      %569 = vmatprep.subr.mxu0 0.0
      %570 = vmatpush1.msra.mxu0 0.0
      %571 = vmatprep.mubr.f32.mxu0 0.0
      %572 = vmatmul.mubr.f32.gmra.mrb[0].mxu0 %v460
      %v573 = vpop.f32.mrb[0].mxu0
      %v574 = vadd.f32 0.0, %v573
      %v575 = vpop.f32.mrb[0].mxu0
      %576 = vmatprep.mubr.f32.mxu0 0.0
      %577 = vmatmul.mubr.f32.gmra.mrb[0].mxu0 %v463
      %v578 = vpop.f32.mrb[0].mxu0
      %v579 = vadd.f32 0.0, %v578
      %v580 = vpop.f32.mrb[0].mxu0
      %581 = vmatprep.mubr.f32.mxu0 0.0
      %582 = vmatmul.mubr.f32.gmra.mrb[0].mxu0 %v466
      %v583 = vpop.f32.mrb[0].mxu0
      %v584 = vadd.f32 0.0, %v583
      %v585 = vpop.f32.mrb[0].mxu0
      %586 = vmatprep.mubr.f32.mxu0 0.0
      %587 = vmatmul.mubr.f32.gmra.mrb[0].mxu0 %v469
      %v588 = vpop.f32.mrb[0].mxu0
      %v589 = vadd.f32 0.0, %v588
      %v590 = vpop.f32.mrb[0].mxu0
      %591 = vmatprep.mubr.f32.mxu0 0.0
      %592 = vmatmul.mubr.f32.gmra.mrb[0].mxu0 %v472
      %v593 = vpop.f32.mrb[0].mxu0
      %v594 = vadd.f32 0.0, %v593
      %v595 = vpop.f32.mrb[0].mxu0
      %596 = vmatprep.mubr.f32.mxu0 0.0
      %597 = vmatmul.mubr.f32.gmra.mrb[0].mxu0 %v475
      %v598 = vpop.f32.mrb[0].mxu0
      %v599 = vadd.f32 0.0, %v598
      %v600 = vpop.f32.mrb[0].mxu0
      %601 = vmatprep.mubr.f32.mxu0 0.0
      %602 = vmatmul.mubr.f32.gmra.mrb[0].mxu0 %v478
      %v603 = vpop.f32.mrb[0].mxu0
      %v604 = vadd.f32 0.0, %v603
      %v605 = vpop.f32.mrb[0].mxu0
      %606 = vmatprep.mubr.f32.mxu0 0.0
      %607 = vmatmul.mubr.f32.gmra.mrb[0].mxu0 %v481
      %v608 = vpop.f32.mrb[0].mxu0
      %v609 = vadd.f32 0.0, %v608
      %v610 = vpop.f32.mrb[0].mxu0
      %611 = vmatprep.mubr.f32.mxu0 0.0
      %612 = vmatmul.mubr.f32.gmra.mrb[0].mxu0 %v484
      %v613 = vpop.f32.mrb[0].mxu0
      %v614 = vadd.f32 0.0, %v613
      %v615 = vpop.f32.mrb[0].mxu0
      %616 = vmatprep.mubr.f32.mxu0 0.0
      %617 = vmatmul.mubr.f32.gmra.mrb[0].mxu0 %v487
      %v618 = vpop.f32.mrb[0].mxu0
      %v619 = vadd.f32 0.0, %v618
      %v620 = vpop.f32.mrb[0].mxu0
      %621 = vmatprep.mubr.f32.mxu0 0.0
      %622 = vmatmul.mubr.f32.gmra.mrb[0].mxu0 %v490
      %v623 = vpop.f32.mrb[0].mxu0
      %v624 = vadd.f32 0.0, %v623
      %v625 = vpop.f32.mrb[0].mxu0
      %626 = vmatprep.mubr.f32.mxu0 0.0
      %627 = vmatmul.mubr.f32.gmra.mrb[0].mxu0 %v493
      %v628 = vpop.f32.mrb[0].mxu0
      %v629 = vadd.f32 0.0, %v628
      %v630 = vpop.f32.mrb[0].mxu0
      %631 = vmatprep.mubr.f32.mxu0 0.0
      %632 = vmatmul.mubr.f32.gmra.mrb[0].mxu0 %v496
      %v633 = vpop.f32.mrb[0].mxu0
      %v634 = vadd.f32 0.0, %v633
      %v635 = vpop.f32.mrb[0].mxu0
      %636 = vmatprep.mubr.f32.mxu0 0.0
      %637 = vmatmul.mubr.f32.gmra.mrb[0].mxu0 %v499
      %v638 = vpop.f32.mrb[0].mxu0
      %v639 = vadd.f32 0.0, %v638
      %v640 = vpop.f32.mrb[0].mxu0
      %641 = vmatprep.mubr.f32.mxu0 0.0
      %642 = vmatmul.mubr.f32.gmra.mrb[0].mxu0 %v502
      %v643 = vpop.f32.mrb[0].mxu0
      %v644 = vadd.f32 0.0, %v643
      %v645 = vpop.f32.mrb[0].mxu0
      %646 = vmatprep.mubr.f32.mxu0 0.0
      %647 = vmatmul.mubr.f32.gmra.mrb[0].mxu0 %v505
      %v648 = vpop.f32.mrb[0].mxu0
      %v649 = vadd.f32 0.0, %v648
      %v650 = vpop.f32.mrb[0].mxu0
      %651 = vdwg.mxu0
      %660 = vrot.lane.b32.xlu0 %v614, 127
      %v661 = vpop.permute.xlu0 %660
      %662 = vrot.lane.b32.xlu0 %v619, 127
      %v663 = vpop.permute.xlu0 %662
      %664 = vrot.lane.b32.xlu0 %v624, 127
      %v665 = vpop.permute.xlu0 %664
      %666 = vrot.lane.b32.xlu0 %v629, 127
      %v667 = vpop.permute.xlu0 %666
      %668 = vrot.lane.b32.xlu0 %v634, 127
      %v669 = vpop.permute.xlu0 %668
      %670 = vrot.lane.b32.xlu0 %v639, 127
      %v671 = vpop.permute.xlu0 %670
      %672 = vrot.lane.b32.xlu0 %v644, 127
      %v673 = vpop.permute.xlu0 %672
      %674 = vrot.lane.b32.xlu0 %v649, 127
      %v675 = vpop.permute.xlu0 %674
      %v684 = vadd.f32 %v574, %v661
      %v685 = vadd.f32 %v579, %v663
      %v686 = vadd.f32 %v584, %v665
      %v687 = vadd.f32 %v589, %v667
      %v688 = vadd.f32 %v594, %v669
      %v689 = vadd.f32 %v599, %v671
      %v690 = vadd.f32 %v604, %v673
      %v691 = vadd.f32 %v609, %v675
      %v692 = vld [vmem:[%s4] sm:$0xff]
      %v693 = vld [vmem:[%s4 + $0x8] sm:$0xff]
      %v694 = vld [vmem:[%s4 + $0x10] sm:$0xff]
      %v695 = vld [vmem:[%s4 + $0x18] sm:$0xff]
      %v696 = vld [vmem:[%s4 + $0x20] sm:$0xff]
      %v697 = vld [vmem:[%s4 + $0x28] sm:$0xff]
      %v698 = vld [vmem:[%s4 + $0x30] sm:$0xff]
      %v699 = vld [vmem:[%s4 + $0x38] sm:$0xff]
      %701 = vset.pattern.permute.xlu0 0
      %702 = vperm.xlu0 %701, %v692
      %v703 = vpop.permute.xlu0 %702
      %706 = vset.pattern.permute.xlu0 0
      %707 = vperm.xlu0 %706, %v693
      %v708 = vpop.permute.xlu0 %707
      %711 = vset.pattern.permute.xlu0 0
      %712 = vperm.xlu0 %711, %v694
      %v713 = vpop.permute.xlu0 %712
      %716 = vset.pattern.permute.xlu0 0
      %717 = vperm.xlu0 %716, %v695
      %v718 = vpop.permute.xlu0 %717
      %721 = vset.pattern.permute.xlu0 0
      %722 = vperm.xlu0 %721, %v696
      %v723 = vpop.permute.xlu0 %722
      %726 = vset.pattern.permute.xlu0 0
      %727 = vperm.xlu0 %726, %v697
      %v728 = vpop.permute.xlu0 %727
      %731 = vset.pattern.permute.xlu0 0
      %732 = vperm.xlu0 %731, %v698
      %v733 = vpop.permute.xlu0 %732
      %736 = vset.pattern.permute.xlu0 0
      %737 = vperm.xlu0 %736, %v699
      %v738 = vpop.permute.xlu0 %737
      %v740 = vadd.f32 %v684, %v703
      %v741 = vadd.f32 %v685, %v708
      %v742 = vadd.f32 %v686, %v713
      %v743 = vadd.f32 %v687, %v718
      %v744 = vadd.f32 %v688, %v723
      %v745 = vadd.f32 %v689, %v728
      %v746 = vadd.f32 %v690, %v733
      %v747 = vadd.f32 %v691, %v738
      %v748 = vmax.f32 %v740, 0.0
      %v749 = vmax.f32 %v741, 0.0
      %v750 = vmax.f32 %v742, 0.0
      %v751 = vmax.f32 %v743, 0.0
      %v752 = vmax.f32 %v744, 0.0
      %v753 = vmax.f32 %v745, 0.0
      %v754 = vmax.f32 %v746, 0.0
      %v755 = vmax.f32 %v747, 0.0
      %v756 = vld [vmem:[%s5] sm:$0xff]
      %v758 = vsel %vm458, %v756, 0
      %760 = vmatprep.subr.mxu0 0.0
      %761 = vmatpush1.msra.mxu0 %v748
      %762 = vmatprep.subr.mxu0 0.0
      %763 = vmatpush1.msra.mxu0 %v749
      %764 = vmatprep.subr.mxu0 0.0
      %765 = vmatpush1.msra.mxu0 %v750
      %766 = vmatprep.subr.mxu0 0.0
      %767 = vmatpush1.msra.mxu0 %v751
      %768 = vmatprep.subr.mxu0 0.0
      %769 = vmatpush1.msra.mxu0 %v752
      %770 = vmatprep.subr.mxu0 0.0
      %771 = vmatpush1.msra.mxu0 %v753
      %772 = vmatprep.subr.mxu0 0.0
      %773 = vmatpush1.msra.mxu0 %v754
      %774 = vmatprep.subr.mxu0 0.0
      %775 = vmatpush1.msra.mxu0 %v755
      %776 = vmatprep.subr.mxu0 0.0
      %777 = vmatpush1.msra.mxu0 0.0
      %778 = vmatprep.subr.mxu0 0.0
      %779 = vmatpush1.msra.mxu0 0.0
      %780 = vmatprep.subr.mxu0 0.0
      %781 = vmatpush1.msra.mxu0 0.0
      %782 = vmatprep.subr.mxu0 0.0
      %783 = vmatpush1.msra.mxu0 0.0
      %784 = vmatprep.subr.mxu0 0.0
      %785 = vmatpush1.msra.mxu0 0.0
      %786 = vmatprep.subr.mxu0 0.0
      %787 = vmatpush1.msra.mxu0 0.0
      %788 = vmatprep.subr.mxu0 0.0
      %789 = vmatpush1.msra.mxu0 0.0
      %790 = vmatprep.subr.mxu0 0.0
      %791 = vmatpush1.msra.mxu0 0.0
      %792 = vmatprep.subr.mxu0 0.0
      %793 = vmatpush1.msra.mxu0 0.0
      %794 = vmatprep.subr.mxu0 0.0
      %795 = vmatpush1.msra.mxu0 0.0
      %796 = vmatprep.subr.mxu0 0.0
      %797 = vmatpush1.msra.mxu0 0.0
      %798 = vmatprep.subr.mxu0 0.0
      %799 = vmatpush1.msra.mxu0 0.0
      %800 = vmatprep.subr.mxu0 0.0
      %801 = vmatpush1.msra.mxu0 0.0
      %802 = vmatprep.subr.mxu0 0.0
      %803 = vmatpush1.msra.mxu0 0.0
      %804 = vmatprep.subr.mxu0 0.0
      %805 = vmatpush1.msra.mxu0 0.0
      %806 = vmatprep.subr.mxu0 0.0
      %807 = vmatpush1.msra.mxu0 0.0
      %808 = vmatprep.subr.mxu0 0.0
      %809 = vmatpush1.msra.mxu0 0.0
      %810 = vmatprep.subr.mxu0 0.0
      %811 = vmatpush1.msra.mxu0 0.0
      %812 = vmatprep.subr.mxu0 0.0
      %813 = vmatpush1.msra.mxu0 0.0
      %814 = vmatprep.subr.mxu0 0.0
      %815 = vmatpush1.msra.mxu0 0.0
      %816 = vmatprep.subr.mxu0 0.0
      %817 = vmatpush1.msra.mxu0 0.0
      %818 = vmatprep.subr.mxu0 0.0
      %819 = vmatpush1.msra.mxu0 0.0
      %820 = vmatprep.subr.mxu0 0.0
      %821 = vmatpush1.msra.mxu0 0.0
      %822 = vmatprep.subr.mxu0 0.0
      %823 = vmatpush1.msra.mxu0 0.0
      %824 = vmatprep.mubr.f32.mxu0 0.0
      %825 = vmatmul.mubr.f32.gmra.mrb[0].mxu0 %v758
      %v826 = vpop.f32.mrb[0].mxu0
      %v827 = vadd.f32 0.0, %v826
      %v828 = vpop.f32.mrb[0].mxu0
      %829 = vdwg.mxu0
      %830 = vst [vmem:[%s246] sm:$0x1] %v827
      %v831 = vmax.f32 %v748, %v752
      %v832 = vmax.f32 %v749, %v753
      %v833 = vmax.f32 %v750, %v754
      %v834 = vmax.f32 %v751, %v755
      %v835 = vmax.f32 %v831, %v832
      %v836 = vmax.f32 %v833, %v834
      %v837 = vmax.f32 %v835, %v836
      %v838 = vrot.slane %v837, 4
      %v839 = vmax.f32 %v837, %v838
      %v840 = vrot.slane %v839, 2
      %v841 = vmax.f32 %v839, %v840
      %v842 = vrot.slane %v841, 1
      %v843 = vmax.f32 %v841, %v842
      %844 = vst [vmem:[%s246 + $0x1] sm:$0x1] %v843
      %p845 = scmp.lt.s32.totalorder %s17, 1
      %s846 = scalar_select %p845, %s17, 1
      %s847 = smul.addr %s846, 2
      %s848 = scalar_lea.vmem %s6, %s847
      // Predicated region
      $region45: #{_inception1_impl.1} parent=43 // pred_check
        %p849 = pneg %p166
      $region46: #{_inception1_impl.1} parent=43 // pred_check_branch
        %851 = sbr.rel (%p849) target = $region48
      $region47: #{_inception1_impl.1} parent=43 // pred_region
        _
      $region48: #{_inception1_impl.1} parent=43 // pred_fallthru
        _
    $region44: #{_inception1_impl.1} parent=5 // pred_fallthru
      _
    %p852 = scmp.le.s32.totalorder 2, %s12
    // Predicated region
    $region49: #{_inception1_impl.1} parent=5 // pred_check
      %p853 = pneg %p852
    $region50: #{_inception1_impl.1} parent=5 // pred_check_branch
      %855 = sbr.rel (%p853) target = $region52
    $region51: #{_inception1_impl.1} parent=5 // pred_region
      %s856 = ssub.s32 %s12, 2
      // Predicated region
      $region53: #{_inception1_impl.1} parent=51 // pred_check
        %p857 = pneg %p172
      $region54: #{_inception1_impl.1} parent=51 // pred_check_branch
        %859 = sbr.rel (%p857) target = $region56
      $region55: #{_inception1_impl.1} parent=51 // pred_region
        %p860 = scmp.lt.s32.totalorder %s18, 1
        %s861 = scalar_select %p860, %s18, 1
        %s862 = smul.addr %s861, 2
        %s863 = scalar_lea.vmem %s6, %s862
      $region56: #{_inception1_impl.1} parent=51 // pred_fallthru
        _
    $region52: #{_inception1_impl.1} parent=5 // pred_fallthru
      _
  $region6: #{_inception1_impl.1} parent=0 // loop_footer
    %s16 = sadd.s32 1, %s12
  $region7: #{_inception1_impl.1} parent=0 // loop_footer_branch
    %11 = sbr.rel target = $region3
  $region8: #{_inception1_impl.1} parent=0 // loop_exit
    _

</llo_original>
